<compile_context>
chip_gen: v6e
topology: v6e:2x2x1
jax: 0.10.0
libtpu: 0.0.40
codegen_flags: <defaults>
</compile_context>

<pallas_src>
import math
from functools import partial

import jax
import jax.numpy as jnp
from jax import lax
from jax.experimental import pallas as pl
from jax.experimental.pallas import tpu as pltpu


# Conservative threshold: 2x (pipeline buffers) of the table plus output
# buffers must still fit the scoped-VMEM budget on v5e/v6e/v7x.
_VMEM_TABLE_BYTES_MAX = 16 << 20


def _choose_block_tokens(n_tokens, requested, itemsize):
    """Multiple of the dtype sublane pack; keep the grid >= 2 when possible."""
    pack = max(8, 32 // max(1, itemsize))            # 8 f32 / 16 bf16 / 32 int8
    bt = max(pack, (requested // pack) * pack)
    while bt > pack and -(-n_tokens // bt) < 2:      # cdiv(n_tokens, bt) < 2
        bt = max(pack, ((bt // 2) // pack) * pack)
    return bt


# -----------------------------------------------------------------------------
# Path 1: VMEM-resident table (small/medium tables).
# -----------------------------------------------------------------------------
def _vmem_resident_kernel(ids_ref,     # SMEM (n_pad,) int32   (scalar prefetch)
                          table_ref,   # VMEM (V, D) full table, constant block
                          out_ref,     # VMEM (TB, D) output block
                          *, block_tokens, scale):
    base = pl.program_id(0) * block_tokens
    # Static store rows, dynamic table rows: pure on-chip gather, no DMA, and
    # the scale is fused in the table dtype right before the dense store.
    for j in range(block_tokens):
        row = ids_ref[base + j]
        out_ref[pl.ds(j, 1), :] = (
            table_ref[pl.ds(row, 1), :] * scale).astype(out_ref.dtype)


def _token_embedding_vmem(ids_flat, table, *, block_tokens, scale):
    n_pad = ids_flat.shape[0]
    vocab, dim = table.shape
    itemsize = jnp.dtype(table.dtype).itemsize
    table_bytes = vocab * dim * itemsize

    # Table (x2 pipeline buffers) + output (x2 double buffer) + slack.
    need = 2 * table_bytes + 4 * block_tokens * dim * itemsize + (1 << 20)
    vmem_limit = int(min(max(need, 32 << 20), 48 << 20))   # safe on v5e/v6e/v7x

    kernel = partial(_vmem_resident_kernel,
                     block_tokens=block_tokens, scale=scale)
    return pl.pallas_call(
        kernel,
        out_shape=jax.ShapeDtypeStruct((n_pad, dim), table.dtype),
        grid_spec=pltpu.PrefetchScalarGridSpec(
            num_scalar_prefetch=1,                       # ids -> SMEM
            grid=(n_pad // block_tokens,),
            in_specs=[pl.BlockSpec((vocab, dim), lambda i, ids: (0, 0))],
            out_specs=pl.BlockSpec((block_tokens, dim), lambda i, ids: (i, 0)),
        ),
        compiler_params=pltpu.CompilerParams(
            dimension_semantics=("parallel",),           # steps are independent
            vmem_limit_bytes=vmem_limit),
        cost_estimate=pl.CostEstimate(
            flops=n_pad * dim,
            transcendentals=0,
            bytes_accessed=table_bytes + n_pad * dim * itemsize + n_pad * 4),
    )(ids_flat, table)


# -----------------------------------------------------------------------------
# Path 2: HBM gather with cross-step double-buffered row DMAs (large tables).
# -----------------------------------------------------------------------------
def _hbm_gather_kernel(ids_ref,      # SMEM (n_pad,) int32   (scalar prefetch)
                       table_hbm,    # HBM  (V, D)           (memory_space=pl.ANY)
                       out_ref,      # VMEM (TB, D) output block
                       gather_buf,   # VMEM (2, TB, D) double buffer
                       sems,         # DMA semaphores (2,): one per slot
                       *, block_tokens, scale):
    i = pl.program_id(0)
    nsteps = pl.num_programs(0)
    slot = lax.rem(i, 2)

    def start_block(block_idx, dst_slot):
        base = block_idx * block_tokens
        # All TB row copies of a block signal the same per-slot semaphore.
        for j in range(block_tokens):
            row = ids_ref[base + j]
            pltpu.make_async_copy(
                table_hbm.at[pl.ds(row, 1), :],
                gather_buf.at[dst_slot, pl.ds(j, 1), :],
                sems.at[dst_slot],
            ).start()

    def wait_block(dst_slot):
        # Aggregate wait: the slot semaphore accumulates exactly
        # TB * D * itemsize bytes, i.e. the full slot buffer.
        pltpu.make_async_copy(
            gather_buf.at[dst_slot], gather_buf.at[dst_slot], sems.at[dst_slot]
        ).wait()

    # Prime slot 0 on the first step.
    @pl.when(i == 0)
    def _():
        start_block(0, slot)

    # Prefetch the next block BEFORE waiting on the current one; all SMEM id
    # reads therefore happen before any DMA wait.
    @pl.when(i + 1 < nsteps)
    def _():
        start_block(i + 1, 1 - slot)

    wait_block(slot)
    out_ref[...] = (gather_buf[slot] * scale).astype(out_ref.dtype)


def _token_embedding_hbm(ids_flat, table, *, block_tokens, scale):
    n_pad = ids_flat.shape[0]
    vocab, dim = table.shape
    itemsize = jnp.dtype(table.dtype).itemsize

    kernel = partial(_hbm_gather_kernel,
                     block_tokens=block_tokens, scale=scale)
    return pl.pallas_call(
        kernel,
        out_shape=jax.ShapeDtypeStruct((n_pad, dim), table.dtype),
        grid_spec=pltpu.PrefetchScalarGridSpec(
            num_scalar_prefetch=1,                         # ids -> SMEM
            grid=(n_pad // block_tokens,),
            in_specs=[pl.BlockSpec(memory_space=pl.ANY)],  # table stays in HBM
            out_specs=pl.BlockSpec((block_tokens, dim), lambda i, ids: (i, 0)),
            scratch_shapes=[
                pltpu.VMEM((2, block_tokens, dim), table.dtype),
                pltpu.SemaphoreType.DMA((2,)),
            ],
        ),
        # The cross-step prefetch carries state between consecutive grid steps,
        # so this axis must stay sequential ("arbitrary").
        compiler_params=pltpu.CompilerParams(
            dimension_semantics=("arbitrary",)),
        cost_estimate=pl.CostEstimate(
            flops=n_pad * dim,
            transcendentals=0,
            bytes_accessed=2 * n_pad * dim * itemsize + n_pad * 4),
    )(ids_flat, table)


# -----------------------------------------------------------------------------
# Public wrapper.
# -----------------------------------------------------------------------------
def token_embedding(ids, table, *, block_tokens=None, force_hbm_gather=False):
    """Returns table[ids] * sqrt(dim) with shape ids.shape + (dim,)."""
    orig_shape = ids.shape
    vocab, dim = table.shape
    scale = math.sqrt(dim)
    itemsize = jnp.dtype(table.dtype).itemsize
    table_bytes = vocab * dim * itemsize

    # Clamp ids so an out-of-range id can never drive an out-of-bounds access.
    ids_flat = jnp.clip(ids.reshape(-1).astype(jnp.int32), 0, vocab - 1)
    n = ids_flat.shape[0]

    use_vmem_table = (not force_hbm_gather) and table_bytes <= _VMEM_TABLE_BYTES_MAX

    requested = block_tokens if block_tokens is not None else (
        128 if use_vmem_table else 64)
    bt = _choose_block_tokens(n, requested, itemsize)

    n_pad = -(-n // bt) * bt
    if n_pad != n:
        ids_flat = jnp.pad(ids_flat, (0, n_pad - n))   # padded rows sliced off below
    # TODO(synk): for very large batches, chunk the ids instead of
    # scalar-prefetching the whole flattened array into SMEM.

    if use_vmem_table:
        out = _token_embedding_vmem(ids_flat, table, block_tokens=bt, scale=scale)
    else:
        out = _token_embedding_hbm(ids_flat, table, block_tokens=bt, scale=scale)

    return out[:n].reshape(*orig_shape, dim)


def token_embedding_reference(ids, table):
    return jnp.take(table, ids, axis=0) * math.sqrt(table.shape[1])


if __name__ == "__main__":
    vocab_size, dim = 512, 128
    B, S = 2, 16   # batch, sequence length

    key = jax.random.PRNGKey(0)
    k_tab, k_ids = jax.random.split(key)

    # nn.init.normal_(weight, mean=0, std=0.02)
    table = 0.02 * jax.random.normal(k_tab, (vocab_size, dim), dtype=jnp.float32)
    ids = jax.random.randint(k_ids, (B, S), 0, vocab_size, dtype=jnp.int32)

    ref = token_embedding_reference(ids, table)

    # Fast path: 256 KiB table -> VMEM-resident gather.
    out = jax.block_until_ready(token_embedding(ids, table))
    assert out.shape == (B, S, dim)
    assert jnp.allclose(out, ref, atol=1e-6, rtol=1e-6)

    # Large-table path (forced here for coverage): HBM table + double-buffered
    # per-row DMA gather with next-block prefetch.
    out_hbm = jax.block_until_ready(
        token_embedding(ids, table, block_tokens=8, force_hbm_gather=True))
    assert jnp.allclose(out_hbm, ref, atol=1e-6, rtol=1e-6)

    print("KERNEL_OK")
</pallas_src>

<mosaic_0001>
module attributes {stable_mosaic.version = 11 : i64} {
  func.func @_vmem_resident_kernel(%arg0: i32, %arg1: memref<32xi32, #tpu.memory_space<smem>>, %arg2: memref<512x128xf32, #tpu.memory_space<vmem>>, %arg3: memref<16x128xf32, #tpu.memory_space<vmem>>) attributes {dimension_semantics = [#tpu.dimension_semantics<parallel>], iteration_bounds = array<i64: 2>, scalar_prefetch = 1 : i64, scratch_operands = 0 : i64, tpu.core_type = #tpu.core_type<tc>, window_params = [{pipeline_mode = #tpu.pipeline_mode<synchronous>, transform_indices = @transform_0, window_bounds = array<i64: 512, 128>}, {transform_indices = @transform_1, window_bounds = array<i64: 16, 128>}]} {
    %c16_i32 = arith.constant 16 : i32
    %0 = arith.muli %arg0, %c16_i32 : i32
    %c0_i32 = arith.constant 0 : i32
    %1 = arith.addi %0, %c0_i32 : i32
    %2 = arith.index_cast %1 : i32 to index
    %3 = memref.load %arg1[%2] : memref<32xi32, #tpu.memory_space<smem>>
    %4 = arith.index_cast %3 : i32 to index
    %c0 = arith.constant 0 : index
    %5 = vector.load %arg2[%4, %c0] : memref<512x128xf32, #tpu.memory_space<vmem>>, vector<1x128xf32>
    %cst = arith.constant 11.3137083 : f32
    %6 = vector.broadcast %cst : f32 to vector<1x128xf32>
    %7 = arith.mulf %5, %6 : vector<1x128xf32>
    %c0_0 = arith.constant 0 : index
    %c0_1 = arith.constant 0 : index
    %8 = vector.load %arg3[%c0_0, %c0_1] : memref<16x128xf32, #tpu.memory_space<vmem>>, vector<1x128xf32>
    tpu.vector_store %arg3[%c0_0, %c0_1], %7 {strides = array<i32>} : memref<16x128xf32, #tpu.memory_space<vmem>>, vector<1x128xf32>,
    %c1_i32 = arith.constant 1 : i32
    %9 = arith.addi %0, %c1_i32 : i32
    %10 = arith.index_cast %9 : i32 to index
    %11 = memref.load %arg1[%10] : memref<32xi32, #tpu.memory_space<smem>>
    %12 = arith.index_cast %11 : i32 to index
    %c0_2 = arith.constant 0 : index
    %13 = vector.load %arg2[%12, %c0_2] : memref<512x128xf32, #tpu.memory_space<vmem>>, vector<1x128xf32>
    %cst_3 = arith.constant 11.3137083 : f32
    %14 = vector.broadcast %cst_3 : f32 to vector<1x128xf32>
    %15 = arith.mulf %13, %14 : vector<1x128xf32>
    %c1 = arith.constant 1 : index
    %c0_4 = arith.constant 0 : index
    %16 = vector.load %arg3[%c1, %c0_4] : memref<16x128xf32, #tpu.memory_space<vmem>>, vector<1x128xf32>
    tpu.vector_store %arg3[%c1, %c0_4], %15 {strides = array<i32>} : memref<16x128xf32, #tpu.memory_space<vmem>>, vector<1x128xf32>,
    %c2_i32 = arith.constant 2 : i32
    %17 = arith.addi %0, %c2_i32 : i32
    %18 = arith.index_cast %17 : i32 to index
    %19 = memref.load %arg1[%18] : memref<32xi32, #tpu.memory_space<smem>>
    %20 = arith.index_cast %19 : i32 to index
    %c0_5 = arith.constant 0 : index
    %21 = vector.load %arg2[%20, %c0_5] : memref<512x128xf32, #tpu.memory_space<vmem>>, vector<1x128xf32>
    %cst_6 = arith.constant 11.3137083 : f32
    %22 = vector.broadcast %cst_6 : f32 to vector<1x128xf32>
    %23 = arith.mulf %21, %22 : vector<1x128xf32>
    %c2 = arith.constant 2 : index
    %c0_7 = arith.constant 0 : index
    %24 = vector.load %arg3[%c2, %c0_7] : memref<16x128xf32, #tpu.memory_space<vmem>>, vector<1x128xf32>
    tpu.vector_store %arg3[%c2, %c0_7], %23 {strides = array<i32>} : memref<16x128xf32, #tpu.memory_space<vmem>>, vector<1x128xf32>,
    %c3_i32 = arith.constant 3 : i32
    %25 = arith.addi %0, %c3_i32 : i32
    %26 = arith.index_cast %25 : i32 to index
    %27 = memref.load %arg1[%26] : memref<32xi32, #tpu.memory_space<smem>>
    %28 = arith.index_cast %27 : i32 to index
    %c0_8 = arith.constant 0 : index
    %29 = vector.load %arg2[%28, %c0_8] : memref<512x128xf32, #tpu.memory_space<vmem>>, vector<1x128xf32>
    %cst_9 = arith.constant 11.3137083 : f32
    %30 = vector.broadcast %cst_9 : f32 to vector<1x128xf32>
    %31 = arith.mulf %29, %30 : vector<1x128xf32>
    %c3 = arith.constant 3 : index
    %c0_10 = arith.constant 0 : index
    %32 = vector.load %arg3[%c3, %c0_10] : memref<16x128xf32, #tpu.memory_space<vmem>>, vector<1x128xf32>
    tpu.vector_store %arg3[%c3, %c0_10], %31 {strides = array<i32>} : memref<16x128xf32, #tpu.memory_space<vmem>>, vector<1x128xf32>,
    %c4_i32 = arith.constant 4 : i32
    %33 = arith.addi %0, %c4_i32 : i32
    %34 = arith.index_cast %33 : i32 to index
    %35 = memref.load %arg1[%34] : memref<32xi32, #tpu.memory_space<smem>>
    %36 = arith.index_cast %35 : i32 to index
    %c0_11 = arith.constant 0 : index
    %37 = vector.load %arg2[%36, %c0_11] : memref<512x128xf32, #tpu.memory_space<vmem>>, vector<1x128xf32>
    %cst_12 = arith.constant 11.3137083 : f32
    %38 = vector.broadcast %cst_12 : f32 to vector<1x128xf32>
    %39 = arith.mulf %37, %38 : vector<1x128xf32>
    %c4 = arith.constant 4 : index
    %c0_13 = arith.constant 0 : index
    %40 = vector.load %arg3[%c4, %c0_13] : memref<16x128xf32, #tpu.memory_space<vmem>>, vector<1x128xf32>
    tpu.vector_store %arg3[%c4, %c0_13], %39 {strides = array<i32>} : memref<16x128xf32, #tpu.memory_space<vmem>>, vector<1x128xf32>,
    %c5_i32 = arith.constant 5 : i32
    %41 = arith.addi %0, %c5_i32 : i32
    %42 = arith.index_cast %41 : i32 to index
    %43 = memref.load %arg1[%42] : memref<32xi32, #tpu.memory_space<smem>>
    %44 = arith.index_cast %43 : i32 to index
    %c0_14 = arith.constant 0 : index
    %45 = vector.load %arg2[%44, %c0_14] : memref<512x128xf32, #tpu.memory_space<vmem>>, vector<1x128xf32>
    %cst_15 = arith.constant 11.3137083 : f32
    %46 = vector.broadcast %cst_15 : f32 to vector<1x128xf32>
    %47 = arith.mulf %45, %46 : vector<1x128xf32>
    %c5 = arith.constant 5 : index
    %c0_16 = arith.constant 0 : index
    %48 = vector.load %arg3[%c5, %c0_16] : memref<16x128xf32, #tpu.memory_space<vmem>>, vector<1x128xf32>
    tpu.vector_store %arg3[%c5, %c0_16], %47 {strides = array<i32>} : memref<16x128xf32, #tpu.memory_space<vmem>>, vector<1x128xf32>,
    %c6_i32 = arith.constant 6 : i32
    %49 = arith.addi %0, %c6_i32 : i32
    %50 = arith.index_cast %49 : i32 to index
    %51 = memref.load %arg1[%50] : memref<32xi32, #tpu.memory_space<smem>>
    %52 = arith.index_cast %51 : i32 to index
    %c0_17 = arith.constant 0 : index
    %53 = vector.load %arg2[%52, %c0_17] : memref<512x128xf32, #tpu.memory_space<vmem>>, vector<1x128xf32>
    %cst_18 = arith.constant 11.3137083 : f32
    %54 = vector.broadcast %cst_18 : f32 to vector<1x128xf32>
    %55 = arith.mulf %53, %54 : vector<1x128xf32>
    %c6 = arith.constant 6 : index
    %c0_19 = arith.constant 0 : index
    %56 = vector.load %arg3[%c6, %c0_19] : memref<16x128xf32, #tpu.memory_space<vmem>>, vector<1x128xf32>
    tpu.vector_store %arg3[%c6, %c0_19], %55 {strides = array<i32>} : memref<16x128xf32, #tpu.memory_space<vmem>>, vector<1x128xf32>,
    %c7_i32 = arith.constant 7 : i32
    %57 = arith.addi %0, %c7_i32 : i32
    %58 = arith.index_cast %57 : i32 to index
    %59 = memref.load %arg1[%58] : memref<32xi32, #tpu.memory_space<smem>>
    %60 = arith.index_cast %59 : i32 to index
    %c0_20 = arith.constant 0 : index
    %61 = vector.load %arg2[%60, %c0_20] : memref<512x128xf32, #tpu.memory_space<vmem>>, vector<1x128xf32>
    %cst_21 = arith.constant 11.3137083 : f32
    %62 = vector.broadcast %cst_21 : f32 to vector<1x128xf32>
    %63 = arith.mulf %61, %62 : vector<1x128xf32>
    %c7 = arith.constant 7 : index
    %c0_22 = arith.constant 0 : index
    %64 = vector.load %arg3[%c7, %c0_22] : memref<16x128xf32, #tpu.memory_space<vmem>>, vector<1x128xf32>
    tpu.vector_store %arg3[%c7, %c0_22], %63 {strides = array<i32>} : memref<16x128xf32, #tpu.memory_space<vmem>>, vector<1x128xf32>,
    %c8_i32 = arith.constant 8 : i32
    %65 = arith.addi %0, %c8_i32 : i32
    %66 = arith.index_cast %65 : i32 to index
    %67 = memref.load %arg1[%66] : memref<32xi32, #tpu.memory_space<smem>>
    %68 = arith.index_cast %67 : i32 to index
    %c0_23 = arith.constant 0 : index
    %69 = vector.load %arg2[%68, %c0_23] : memref<512x128xf32, #tpu.memory_space<vmem>>, vector<1x128xf32>
    %cst_24 = arith.constant 11.3137083 : f32
    %70 = vector.broadcast %cst_24 : f32 to vector<1x128xf32>
    %71 = arith.mulf %69, %70 : vector<1x128xf32>
    %c8 = arith.constant 8 : index
    %c0_25 = arith.constant 0 : index
    %72 = vector.load %arg3[%c8, %c0_25] : memref<16x128xf32, #tpu.memory_space<vmem>>, vector<1x128xf32>
    tpu.vector_store %arg3[%c8, %c0_25], %71 {strides = array<i32>} : memref<16x128xf32, #tpu.memory_space<vmem>>, vector<1x128xf32>,
    %c9_i32 = arith.constant 9 : i32
    %73 = arith.addi %0, %c9_i32 : i32
    %74 = arith.index_cast %73 : i32 to index
    %75 = memref.load %arg1[%74] : memref<32xi32, #tpu.memory_space<smem>>
    %76 = arith.index_cast %75 : i32 to index
    %c0_26 = arith.constant 0 : index
    %77 = vector.load %arg2[%76, %c0_26] : memref<512x128xf32, #tpu.memory_space<vmem>>, vector<1x128xf32>
    %cst_27 = arith.constant 11.3137083 : f32
    %78 = vector.broadcast %cst_27 : f32 to vector<1x128xf32>
    %79 = arith.mulf %77, %78 : vector<1x128xf32>
    %c9 = arith.constant 9 : index
    %c0_28 = arith.constant 0 : index
    %80 = vector.load %arg3[%c9, %c0_28] : memref<16x128xf32, #tpu.memory_space<vmem>>, vector<1x128xf32>
    tpu.vector_store %arg3[%c9, %c0_28], %79 {strides = array<i32>} : memref<16x128xf32, #tpu.memory_space<vmem>>, vector<1x128xf32>,
    %c10_i32 = arith.constant 10 : i32
    %81 = arith.addi %0, %c10_i32 : i32
    %82 = arith.index_cast %81 : i32 to index
    %83 = memref.load %arg1[%82] : memref<32xi32, #tpu.memory_space<smem>>
    %84 = arith.index_cast %83 : i32 to index
    %c0_29 = arith.constant 0 : index
    %85 = vector.load %arg2[%84, %c0_29] : memref<512x128xf32, #tpu.memory_space<vmem>>, vector<1x128xf32>
    %cst_30 = arith.constant 11.3137083 : f32
    %86 = vector.broadcast %cst_30 : f32 to vector<1x128xf32>
    %87 = arith.mulf %85, %86 : vector<1x128xf32>
    %c10 = arith.constant 10 : index
    %c0_31 = arith.constant 0 : index
    %88 = vector.load %arg3[%c10, %c0_31] : memref<16x128xf32, #tpu.memory_space<vmem>>, vector<1x128xf32>
    tpu.vector_store %arg3[%c10, %c0_31], %87 {strides = array<i32>} : memref<16x128xf32, #tpu.memory_space<vmem>>, vector<1x128xf32>,
    %c11_i32 = arith.constant 11 : i32
    %89 = arith.addi %0, %c11_i32 : i32
    %90 = arith.index_cast %89 : i32 to index
    %91 = memref.load %arg1[%90] : memref<32xi32, #tpu.memory_space<smem>>
    %92 = arith.index_cast %91 : i32 to index
    %c0_32 = arith.constant 0 : index
    %93 = vector.load %arg2[%92, %c0_32] : memref<512x128xf32, #tpu.memory_space<vmem>>, vector<1x128xf32>
    %cst_33 = arith.constant 11.3137083 : f32
    %94 = vector.broadcast %cst_33 : f32 to vector<1x128xf32>
    %95 = arith.mulf %93, %94 : vector<1x128xf32>
    %c11 = arith.constant 11 : index
    %c0_34 = arith.constant 0 : index
    %96 = vector.load %arg3[%c11, %c0_34] : memref<16x128xf32, #tpu.memory_space<vmem>>, vector<1x128xf32>
    tpu.vector_store %arg3[%c11, %c0_34], %95 {strides = array<i32>} : memref<16x128xf32, #tpu.memory_space<vmem>>, vector<1x128xf32>,
    %c12_i32 = arith.constant 12 : i32
    %97 = arith.addi %0, %c12_i32 : i32
    %98 = arith.index_cast %97 : i32 to index
    %99 = memref.load %arg1[%98] : memref<32xi32, #tpu.memory_space<smem>>
    %100 = arith.index_cast %99 : i32 to index
    %c0_35 = arith.constant 0 : index
    %101 = vector.load %arg2[%100, %c0_35] : memref<512x128xf32, #tpu.memory_space<vmem>>, vector<1x128xf32>
    %cst_36 = arith.constant 11.3137083 : f32
    %102 = vector.broadcast %cst_36 : f32 to vector<1x128xf32>
    %103 = arith.mulf %101, %102 : vector<1x128xf32>
    %c12 = arith.constant 12 : index
    %c0_37 = arith.constant 0 : index
    %104 = vector.load %arg3[%c12, %c0_37] : memref<16x128xf32, #tpu.memory_space<vmem>>, vector<1x128xf32>
    tpu.vector_store %arg3[%c12, %c0_37], %103 {strides = array<i32>} : memref<16x128xf32, #tpu.memory_space<vmem>>, vector<1x128xf32>,
    %c13_i32 = arith.constant 13 : i32
    %105 = arith.addi %0, %c13_i32 : i32
    %106 = arith.index_cast %105 : i32 to index
    %107 = memref.load %arg1[%106] : memref<32xi32, #tpu.memory_space<smem>>
    %108 = arith.index_cast %107 : i32 to index
    %c0_38 = arith.constant 0 : index
    %109 = vector.load %arg2[%108, %c0_38] : memref<512x128xf32, #tpu.memory_space<vmem>>, vector<1x128xf32>
    %cst_39 = arith.constant 11.3137083 : f32
    %110 = vector.broadcast %cst_39 : f32 to vector<1x128xf32>
    %111 = arith.mulf %109, %110 : vector<1x128xf32>
    %c13 = arith.constant 13 : index
    %c0_40 = arith.constant 0 : index
    %112 = vector.load %arg3[%c13, %c0_40] : memref<16x128xf32, #tpu.memory_space<vmem>>, vector<1x128xf32>
    tpu.vector_store %arg3[%c13, %c0_40], %111 {strides = array<i32>} : memref<16x128xf32, #tpu.memory_space<vmem>>, vector<1x128xf32>,
    %c14_i32 = arith.constant 14 : i32
    %113 = arith.addi %0, %c14_i32 : i32
    %114 = arith.index_cast %113 : i32 to index
    %115 = memref.load %arg1[%114] : memref<32xi32, #tpu.memory_space<smem>>
    %116 = arith.index_cast %115 : i32 to index
    %c0_41 = arith.constant 0 : index
    %117 = vector.load %arg2[%116, %c0_41] : memref<512x128xf32, #tpu.memory_space<vmem>>, vector<1x128xf32>
    %cst_42 = arith.constant 11.3137083 : f32
    %118 = vector.broadcast %cst_42 : f32 to vector<1x128xf32>
    %119 = arith.mulf %117, %118 : vector<1x128xf32>
    %c14 = arith.constant 14 : index
    %c0_43 = arith.constant 0 : index
    %120 = vector.load %arg3[%c14, %c0_43] : memref<16x128xf32, #tpu.memory_space<vmem>>, vector<1x128xf32>
    tpu.vector_store %arg3[%c14, %c0_43], %119 {strides = array<i32>} : memref<16x128xf32, #tpu.memory_space<vmem>>, vector<1x128xf32>,
    %c15_i32 = arith.constant 15 : i32
    %121 = arith.addi %0, %c15_i32 : i32
    %122 = arith.index_cast %121 : i32 to index
    %123 = memref.load %arg1[%122] : memref<32xi32, #tpu.memory_space<smem>>
    %124 = arith.index_cast %123 : i32 to index
    %c0_44 = arith.constant 0 : index
    %125 = vector.load %arg2[%124, %c0_44] : memref<512x128xf32, #tpu.memory_space<vmem>>, vector<1x128xf32>
    %cst_45 = arith.constant 11.3137083 : f32
    %126 = vector.broadcast %cst_45 : f32 to vector<1x128xf32>
    %127 = arith.mulf %125, %126 : vector<1x128xf32>
    %c15 = arith.constant 15 : index
    %c0_46 = arith.constant 0 : index
    %128 = vector.load %arg3[%c15, %c0_46] : memref<16x128xf32, #tpu.memory_space<vmem>>, vector<1x128xf32>
    tpu.vector_store %arg3[%c15, %c0_46], %127 {strides = array<i32>} : memref<16x128xf32, #tpu.memory_space<vmem>>, vector<1x128xf32>,
    return
  }
  func.func @transform_0(%arg0: i32, %arg1: memref<32xi32, #tpu.memory_space<smem>>) -> (i32, i32) {
    %c0_i32 = arith.constant 0 : i32
    %c0_i32_0 = arith.constant 0 : i32
    %c0_i32_1 = arith.constant 0 : i32
    return %c0_i32, %c0_i32_0 : i32, i32
  }
  func.func @transform_1(%arg0: i32, %arg1: memref<32xi32, #tpu.memory_space<smem>>) -> (i32, i32) {
    %c0_i32 = arith.constant 0 : i32
    %c0_i32_0 = arith.constant 0 : i32
    return %arg0, %c0_i32 : i32, i32
  }
}

</mosaic_0001>

<llo_original>
// kernel: tpu_custom_call.1
$region0: #{tpu_custom_call.1}
  #allocation0 [shape = 'u32[]', space=smem, size = 0x4, offset = 0x4, fixed_abs, tag = 'smem constant byte address 0x4 - core index']
  #allocation1 [shape = 'u32[144,128]{1,0:T(1,128)}', space=vmem, size = 0x12000, scoped, tag = 'internal scratch']
  #allocation2 [shape = 's32[1]{0}', space=sflag, size = 0x4, scoped, tag = 'scoped memory for tpu_custom_call.1']
  #allocation3 [shape = 'u8[512]{0}', space=smem, size = 0x200, scoped, tag = 'prefetched SMEM operand 0']
  %s0 = inlined_call_operand.hbm [shape: s32[32], index: 0, kind: input, shape index: {}]
  %s1 = inlined_call_operand.hbm [shape: f32[512,128], index: 1, kind: input, shape index: {}]
  %s2 = inlined_call_operand.hbm [shape: f32[32,128], index: 2, kind: output, shape index: {}]
  %s3 = sld [smem:[#allocation0]]
  $region41: #{tpu_custom_call.1} parent=0
    _
  %s5 = ssub.s32 1, %s3
  %s6 = scalar_select 0, %s5, %s3
  %8 = dma.hbm_to_smem %s0, 16, [#allocation3], [#allocation2]
  %9 = dma.done [#allocation2], 16
  %10 = sfence
  $region1: #{tpu_custom_call.1} parent=0
    #allocation4 [shape = 'u8[262144]{0}', space=vmem, size = 0x40000, scoped, tag = 'input window, operand 1, single buffered']
    #allocation5 [shape = 's32[2]{0}', space=sflag, size = 0x8, scoped, tag = 'scoped memory for tpu_custom_call.1']
    #allocation6 [shape = 's32[2]{0}', space=sflag, size = 0x8, scoped, tag = 'scoped memory for tpu_custom_call.1']
    #allocation7 [shape = 'u8[16384]{0}', space=vmem, size = 0x4000, scoped, tag = 'output window, operand 0']
    %11 = vsyncpa [#allocation5], 0
    %12 = vsyncpa [#allocation6], 0
    %s13 = scalar_lea.sflag [#allocation6], 1
    %14 = vsyncpa %s13, 0
    loop: start=0, step=1, limit=4
    $region2: #{tpu_custom_call.1} parent=1 // loop_pre_header
      _
    $region3: #{tpu_custom_call.1} parent=1 // loop_header
      %s16 = sphi 0, %s20
      %p17 = scmp.ge.s32.totalorder %s16, 4
      %s24 = sphi 0, %s24
      %s26 = sphi 0, %s24
      %s27 = sphi 0, %s26
      %s41 = sphi 0, %s27
      %s47 = sphi 0, %s49
      %s50 = sphi 0, %s47
      %s51 = sphi 0, %s50
      %s67 = sphi 0, %s51
    $region4: #{tpu_custom_call.1} parent=1 // loop_header_branch
      %19 = sbr.rel (%p17) target = $region8
    $region5: #{tpu_custom_call.1} parent=1 // loop_body
      %s21 = ssub.s32 %s16, 1
      %s22 = ssub.s32 %s16, 2
      %s23 = sadd.s32 %s16, 1
      %s25 = sadd.s32 %s24, 1
      %p28 = scmp.eq.s32.totalorder %s16, 1
      %p29 = scmp.ne.s32.totalorder %s24, %s26
      %p30 = scmp.eq.s32.totalorder %s16, 0
      %p31 = por %p29, %p30
      %p32 = scmp.ne.s32.totalorder %s24, %s26
      %p33 = scmp.eq.s32.totalorder %s21, 1
      %p34 = por %p32, %p33
      %p35 = scmp.ne.s32.totalorder %s26, %s27
      %p36 = scmp.eq.s32.totalorder %s21, 0
      %p37 = por %p35, %p36
      %p38 = scmp.ne.s32.totalorder %s26, %s27
      %p39 = scmp.eq.s32.totalorder %s22, 1
      %p40 = por %p38, %p39
      %p42 = scmp.ne.s32.totalorder %s27, %s41
      %p43 = scmp.eq.s32.totalorder %s22, 0
      %p44 = por %p42, %p43
      %s45 = ssub.s32 %s16, %s23
      %p46 = scmp.eq.s32.totalorder %s45, 0
      %s48 = sadd.s32 %s47, 1
      %s49 = scalar_select %p46, %s47, %s48
      %p52 = pneg %p46
      %p53 = scmp.eq.s32.totalorder %s16, 1
      %p54 = por %p52, %p53
      %p55 = scmp.ne.s32.totalorder %s47, %s50
      %p56 = scmp.eq.s32.totalorder %s16, 0
      %p57 = por %p55, %p56
      %p58 = scmp.ne.s32.totalorder %s47, %s50
      %p59 = scmp.eq.s32.totalorder %s21, 1
      %p60 = por %p58, %p59
      %p61 = scmp.ne.s32.totalorder %s50, %s51
      %p62 = scmp.eq.s32.totalorder %s21, 0
      %p63 = por %p61, %p62
      %p64 = scmp.ne.s32.totalorder %s50, %s51
      %p65 = scmp.eq.s32.totalorder %s22, 1
      %p66 = por %p64, %p65
      %p68 = scmp.ne.s32.totalorder %s51, %s67
      %p69 = scmp.eq.s32.totalorder %s22, 0
      %p70 = por %p68, %p69
      %p71 = scmp.le.s32.totalorder 1, %s16
      %p72 = scmp.lt.s32.totalorder %s16, 3
      %p73 = pnand %p71, %p72
      %p74 = pneg %p73
      // Predicated region
      $region9: #{tpu_custom_call.1} parent=5 // pred_check
        _
      $region10: #{tpu_custom_call.1} parent=5 // pred_check_branch
        %76 = sbr.rel (%p73) target = $region12
      $region11: #{tpu_custom_call.1} parent=5 // pred_region
        %s77 = ssub.s32 %s16, 1
        // Predicated region
        $region13: #{tpu_custom_call.1} parent=11 // pred_check
          %p78 = pneg %p37
        $region14: #{tpu_custom_call.1} parent=11 // pred_check_branch
          %80 = sbr.rel (%p78) target = $region16
        $region15: #{tpu_custom_call.1} parent=11 // pred_region
          %s82 = ssub.s32 8192, 8192
          %83 = vsyncadd [#allocation5], %s82
          %s84 = sshll.u32 [#allocation4], 4
          %s85 = int_to_ptr.vmem [resolvable:$true] %s84
          %90 = dma.hbm_to_vmem [thread:$0]  %s1, 8192, %s85, [#allocation5], 128, 128, 8
        $region16: #{tpu_custom_call.1} parent=11 // pred_fallthru
          _
      $region12: #{tpu_custom_call.1} parent=5 // pred_fallthru
        _
      %p91 = scmp.lt.s32.totalorder %s16, 2
      // Predicated region
      $region17: #{tpu_custom_call.1} parent=5 // pred_check
        %p92 = pneg %p91
      $region18: #{tpu_custom_call.1} parent=5 // pred_check_branch
        %94 = sbr.rel (%p92) target = $region20
      $region19: #{tpu_custom_call.1} parent=5 // pred_region
        _
      $region20: #{tpu_custom_call.1} parent=5 // pred_fallthru
        _
      %p95 = scmp.le.s32.totalorder 1, %s16
      %p96 = scmp.lt.s32.totalorder %s16, 3
      %p97 = pnand %p95, %p96
      %p98 = pneg %p97
      // Predicated region
      $region21: #{tpu_custom_call.1} parent=5 // pred_check
        _
      $region22: #{tpu_custom_call.1} parent=5 // pred_check_branch
        %100 = sbr.rel (%p97) target = $region24
      $region23: #{tpu_custom_call.1} parent=5 // pred_region
        %s101 = ssub.s32 %s16, 1
        // Predicated region
        $region25: #{tpu_custom_call.1} parent=23 // pred_check
          %p102 = pneg %p37
        $region26: #{tpu_custom_call.1} parent=23 // pred_check_branch
          %104 = sbr.rel (%p102) target = $region28
        $region27: #{tpu_custom_call.1} parent=23 // pred_region
          %105 = dma.done [#allocation5], 8192
        $region28: #{tpu_custom_call.1} parent=23 // pred_fallthru
          _
        %p106 = pneg %p37
        %p107 = pneg %p34
        %p108 = pneg %p63
        %p109 = pneg %p60
        %s110 = sand.u32 %s50, 1
        %s111 = scalar_lea.sflag [#allocation6], %s110
        %s112 = sand.u32 %s50, 1
        %s113 = smul.addr %s112, 16
        %s114 = scalar_lea.vmem [#allocation7], %s113
        %s115 = smul.u32 2, %s21
        %s116 = smul.u32 %s21, 16
        %s117 = sld [smem:[#allocation3 + %s116]]
        %s118 = scalar_lea.vmem [#allocation4], %s117
        %v119 = vld [vmem:[%s118] sm:$0x1]
        %v120 = vmul.f32 %v119, 11.313708
        %121 = vst [vmem:[%s114] sm:$0x1] %v120
        %s122 = sadd.s32 %s116, 1
        %s123 = sld [smem:[#allocation3 + %s122]]
        %s124 = scalar_lea.vmem [#allocation4], %s123
        %v125 = vld [vmem:[%s124] sm:$0x1]
        %v126 = vmul.f32 %v125, 11.313708
        %127 = vst [vmem:[%s114 + $0x1] sm:$0x1] %v126
        %s128 = sadd.s32 %s116, 2
        %s129 = sld [smem:[#allocation3 + %s128]]
        %s130 = scalar_lea.vmem [#allocation4], %s129
        %v131 = vld [vmem:[%s130] sm:$0x1]
        %v132 = vmul.f32 %v131, 11.313708
        %133 = vst [vmem:[%s114 + $0x2] sm:$0x1] %v132
        %s134 = sadd.s32 %s116, 3
        %s135 = sld [smem:[#allocation3 + %s134]]
        %s136 = scalar_lea.vmem [#allocation4], %s135
        %v137 = vld [vmem:[%s136] sm:$0x1]
        %v138 = vmul.f32 %v137, 11.313708
        %139 = vst [vmem:[%s114 + $0x3] sm:$0x1] %v138
        %s140 = sadd.s32 %s116, 4
        %s141 = sld [smem:[#allocation3 + %s140]]
        %s142 = scalar_lea.vmem [#allocation4], %s141
        %v143 = vld [vmem:[%s142] sm:$0x1]
        %v144 = vmul.f32 %v143, 11.313708
        %145 = vst [vmem:[%s114 + $0x4] sm:$0x1] %v144
        %s146 = sadd.s32 %s116, 5
        %s147 = sld [smem:[#allocation3 + %s146]]
        %s148 = scalar_lea.vmem [#allocation4], %s147
        %v149 = vld [vmem:[%s148] sm:$0x1]
        %v150 = vmul.f32 %v149, 11.313708
        %151 = vst [vmem:[%s114 + $0x5] sm:$0x1] %v150
        %s152 = sadd.s32 %s116, 6
        %s153 = sld [smem:[#allocation3 + %s152]]
        %s154 = scalar_lea.vmem [#allocation4], %s153
        %v155 = vld [vmem:[%s154] sm:$0x1]
        %v156 = vmul.f32 %v155, 11.313708
        %157 = vst [vmem:[%s114 + $0x6] sm:$0x1] %v156
        %s158 = sadd.s32 %s116, 7
        %s159 = sld [smem:[#allocation3 + %s158]]
        %s160 = scalar_lea.vmem [#allocation4], %s159
        %v161 = vld [vmem:[%s160] sm:$0x1]
        %v162 = vmul.f32 %v161, 11.313708
        %163 = vst [vmem:[%s114 + $0x7] sm:$0x1] %v162
        %s164 = sadd.s32 %s116, 8
        %s165 = sld [smem:[#allocation3 + %s164]]
        %s166 = scalar_lea.vmem [#allocation4], %s165
        %v167 = vld [vmem:[%s166] sm:$0x1]
        %v168 = vmul.f32 %v167, 11.313708
        %169 = vst [vmem:[%s114 + $0x8] sm:$0x1] %v168
        %s170 = sadd.s32 %s116, 9
        %s171 = sld [smem:[#allocation3 + %s170]]
        %s172 = scalar_lea.vmem [#allocation4], %s171
        %v173 = vld [vmem:[%s172] sm:$0x1]
        %v174 = vmul.f32 %v173, 11.313708
        %175 = vst [vmem:[%s114 + $0x9] sm:$0x1] %v174
        %s176 = sadd.s32 %s116, 10
        %s177 = sld [smem:[#allocation3 + %s176]]
        %s178 = scalar_lea.vmem [#allocation4], %s177
        %v179 = vld [vmem:[%s178] sm:$0x1]
        %v180 = vmul.f32 %v179, 11.313708
        %181 = vst [vmem:[%s114 + $0xa] sm:$0x1] %v180
        %s182 = sadd.s32 %s116, 11
        %s183 = sld [smem:[#allocation3 + %s182]]
        %s184 = scalar_lea.vmem [#allocation4], %s183
        %v185 = vld [vmem:[%s184] sm:$0x1]
        %v186 = vmul.f32 %v185, 11.313708
        %187 = vst [vmem:[%s114 + $0xb] sm:$0x1] %v186
        %s188 = sadd.s32 %s116, 12
        %s189 = sld [smem:[#allocation3 + %s188]]
        %s190 = scalar_lea.vmem [#allocation4], %s189
        %v191 = vld [vmem:[%s190] sm:$0x1]
        %v192 = vmul.f32 %v191, 11.313708
        %193 = vst [vmem:[%s114 + $0xc] sm:$0x1] %v192
        %s194 = sadd.s32 %s116, 13
        %s195 = sld [smem:[#allocation3 + %s194]]
        %s196 = scalar_lea.vmem [#allocation4], %s195
        %v197 = vld [vmem:[%s196] sm:$0x1]
        %v198 = vmul.f32 %v197, 11.313708
        %199 = vst [vmem:[%s114 + $0xd] sm:$0x1] %v198
        %s200 = sadd.s32 %s116, 14
        %s201 = sld [smem:[#allocation3 + %s200]]
        %s202 = scalar_lea.vmem [#allocation4], %s201
        %v203 = vld [vmem:[%s202] sm:$0x1]
        %v204 = vmul.f32 %v203, 11.313708
        %205 = vst [vmem:[%s114 + $0xe] sm:$0x1] %v204
        %s206 = sadd.s32 %s116, 15
        %s207 = sld [smem:[#allocation3 + %s206]]
        %s208 = scalar_lea.vmem [#allocation4], %s207
        %v209 = vld [vmem:[%s208] sm:$0x1]
        %v210 = vmul.f32 %v209, 11.313708
        %211 = vst [vmem:[%s114 + $0xf] sm:$0x1] %v210
        %s212 = sand.u32 %s50, 1
        %s213 = scalar_lea.sflag [#allocation6], %s212
        %s214 = sand.u32 %s50, 1
        %s215 = smul.addr %s214, 16
        %s216 = scalar_lea.vmem [#allocation7], %s215
        // Predicated region
        $region29: #{tpu_custom_call.1} parent=23 // pred_check
          %p217 = pneg %p60
        $region30: #{tpu_custom_call.1} parent=23 // pred_check_branch
          %219 = sbr.rel (%p217) target = $region32
        $region31: #{tpu_custom_call.1} parent=23 // pred_region
          %s220 = smul.u32 2, %s21
          %s222 = ssub.s32 256, 256
          %223 = vsyncadd %s213, %s222
          %s224 = smul.addr %s220, 128
          %s225 = scalar_lea.hbm %s2, %s224
          %s226 = sshll.u32 %s216, 4
          %s227 = int_to_ptr.vmem [resolvable:$true] %s226
          %232 = dma.vmem_to_hbm [thread:$0]  %s227, 256, %s225, %s213, 128, 128, 8
        $region32: #{tpu_custom_call.1} parent=23 // pred_fallthru
          _
      $region24: #{tpu_custom_call.1} parent=5 // pred_fallthru
        _
      %p233 = scmp.le.s32.totalorder 2, %s16
      // Predicated region
      $region33: #{tpu_custom_call.1} parent=5 // pred_check
        %p234 = pneg %p233
      $region34: #{tpu_custom_call.1} parent=5 // pred_check_branch
        %236 = sbr.rel (%p234) target = $region36
      $region35: #{tpu_custom_call.1} parent=5 // pred_region
        %s237 = ssub.s32 %s16, 2
        // Predicated region
        $region37: #{tpu_custom_call.1} parent=35 // pred_check
          %p238 = pneg %p66
        $region38: #{tpu_custom_call.1} parent=35 // pred_check_branch
          %240 = sbr.rel (%p238) target = $region40
        $region39: #{tpu_custom_call.1} parent=35 // pred_region
          %s241 = sand.u32 %s51, 1
          %s242 = scalar_lea.sflag [#allocation6], %s241
          %s243 = sand.u32 %s51, 1
          %s244 = smul.addr %s243, 16
          %s245 = scalar_lea.vmem [#allocation7], %s244
          %246 = dma.done %s242, 256
        $region40: #{tpu_custom_call.1} parent=35 // pred_fallthru
          _
      $region36: #{tpu_custom_call.1} parent=5 // pred_fallthru
        _
    $region6: #{tpu_custom_call.1} parent=1 // loop_footer
      %s20 = sadd.s32 1, %s16
    $region7: #{tpu_custom_call.1} parent=1 // loop_footer_branch
      %15 = sbr.rel target = $region3
    $region8: #{tpu_custom_call.1} parent=1 // loop_exit
      _
    %247 = vsyncpa [#allocation5], 1
    %s248 = scalar_lea.sflag [#allocation5], 1
    %249 = vsyncpa %s248, 1
    %250 = vsyncpa [#allocation6], 1
    %s251 = scalar_lea.sflag [#allocation6], 1
    %252 = vsyncpa %s251, 1

</llo_original>
